<compile_context>
chip_gen: v5e
topology: v5e:2x2
jax: 0.10.0
libtpu: 0.0.40
codegen_flags: <defaults>
</compile_context>

<pallas_src>
import functools
import math

import jax
import jax.numpy as jnp
from jax.experimental import pallas as pl
from jax.experimental.pallas import tpu as pltpu

DROPOUT_RATE = 0.5
LAYER_SIZES = [12, 128, 64, 32, 16, 1]
_MAX_TILE_M = 512          # rows per grid step; multiple of 8, well under VMEM limits


def _round_up(n, m):
    return ((n + m - 1) // m) * m


def mlp_kernel(*refs, training):
    """One batch tile of: 4x (Linear, ReLU, Dropout) -> Linear -> sigmoid."""
    if training:
        (x_ref,
         w1, b1, w2, b2, w3, b3, w4, b4, w5, b5,
         m1, m2, m3, m4,
         out_ref) = refs
        masks = (m1, m2, m3, m4)
    else:
        (x_ref,
         w1, b1, w2, b2, w3, b3, w4, b4, w5, b5,
         out_ref) = refs
        masks = (None, None, None, None)

    h = x_ref[...].astype(jnp.float32)
    for (w_ref, b_ref), m_ref in zip(
            ((w1, b1), (w2, b2), (w3, b3), (w4, b4)), masks):
        # bf16 MXU feed, f32 accumulation; elementwise math stays f32.
        h = jnp.dot(h.astype(jnp.bfloat16), w_ref[...],
                    preferred_element_type=jnp.float32) + b_ref[...]
        h = jnp.maximum(h, 0.0)                       # ReLU
        if training:
            # Inverted dropout: mask already carries the 1/(1-p) scale, so this is
            # a single VPU multiply per element.
            h = h * m_ref[...]

    logits = jnp.dot(h.astype(jnp.bfloat16), w5[...],
                     preferred_element_type=jnp.float32) + b5[...]
    # NOTE: the (TILE_M, 1) output is lane-sparse (masked stores), but at only
    # ~TILE_M/8 stores per step the store slot is far from binding for this tiny
    # model, so we keep the natural (batch, 1) layout instead of transposing.
    out_ref[...] = jax.nn.sigmoid(logits)            # torch.sigmoid


def init_params(key):
    """Params mimicking torch.nn.Linear init: U(-1/sqrt(fan_in), +1/sqrt(fan_in))."""
    params = []
    for i in range(len(LAYER_SIZES) - 1):
        fan_in, fan_out = LAYER_SIZES[i], LAYER_SIZES[i + 1]
        key, kw, kb = jax.random.split(key, 3)
        bound = 1.0 / math.sqrt(fan_in)
        w = jax.random.uniform(kw, (fan_in, fan_out), jnp.float32, -bound, bound)
        b = jax.random.uniform(kb, (1, fan_out), jnp.float32, -bound, bound)
        params.append((w, b))
    return params


def dropout_model_forward(x, params, *, seed=0, training=False, rate=DROPOUT_RATE):
    """Full forward pass: Flatten -> 4x (Linear, ReLU, Dropout) -> Linear -> sigmoid."""
    batch = x.shape[0]
    x2 = x.reshape(batch, -1).astype(jnp.float32)    # nn.Flatten()
    assert x2.shape[1] == LAYER_SIZES[0]

    use_dropout = training and rate > 0.0

    # Batch tiling: one grid step per TILE_M rows (double-buffered HBM<->VMEM).
    tile_m = min(_MAX_TILE_M, _round_up(batch, 8))
    padded = _round_up(batch, tile_m)
    if padded != batch:
        x2 = jnp.pad(x2, ((0, padded - batch), (0, 0)))
    grid = (padded // tile_m,)

    flat_inputs = [x2]
    in_specs = [pl.BlockSpec((tile_m, LAYER_SIZES[0]), lambda i: (i, 0))]

    # Weights (bf16 MXU feed) + f32 biases; constant index_map -> VMEM-resident.
    for w, b in params:
        flat_inputs += [w.astype(jnp.bfloat16), b.astype(jnp.float32)]
        in_specs += [pl.BlockSpec(w.shape, lambda i: (0, 0)),
                     pl.BlockSpec(b.shape, lambda i: (0, 0))]

    # TODO(synk): dropout masks are drawn with jax.random in the wrapper instead of
    # the in-kernel TPU hardware PRNG (pltpu.prng_seed has no interpret-mode
    # lowering); semantics match nn.Dropout but not torch's RNG bit-stream.
    if use_dropout:
        key = jax.random.PRNGKey(seed)
        scale = 1.0 / (1.0 - rate)
        for width in LAYER_SIZES[1:-1]:
            key, sub = jax.random.split(key)
            keep = jax.random.bernoulli(sub, 1.0 - rate, (padded, width))
            flat_inputs.append(keep.astype(jnp.float32) * scale)   # 0 or 1/(1-p)
            in_specs.append(pl.BlockSpec((tile_m, width), lambda i: (i, 0)))

    flops = 2 * padded * sum(a * b for a, b in zip(LAYER_SIZES[:-1], LAYER_SIZES[1:]))
    bytes_accessed = int(sum(int(v.size) * v.dtype.itemsize for v in flat_inputs)
                         + padded * 4)
    cost = pl.CostEstimate(flops=flops, transcendentals=padded,
                           bytes_accessed=bytes_accessed)

    kernel = functools.partial(mlp_kernel, training=use_dropout)
    out = pl.pallas_call(
        kernel,
        grid=grid,
        out_shape=jax.ShapeDtypeStruct((padded, 1), jnp.float32),
        in_specs=in_specs,
        out_specs=pl.BlockSpec((tile_m, 1), lambda i: (i, 0)),
        compiler_params=pltpu.CompilerParams(
            dimension_semantics=("parallel",)),   # v7x: shard batch over 2 TCs
        cost_estimate=cost,
    )(*flat_inputs)
    return out[:batch]


def reference_forward(x, params):
    """Pure-JAX f32 eval-mode reference (dropout = identity)."""
    h = x.reshape(x.shape[0], -1).astype(jnp.float32)
    for i, (w, b) in enumerate(params):
        h = h @ w + b
        if i < len(params) - 1:
            h = jnp.maximum(h, 0.0)
    return jax.nn.sigmoid(h)


if __name__ == "__main__":
    key = jax.random.PRNGKey(0)
    key, kx, kp = jax.random.split(key, 3)

    batch = 8
    x = jax.random.normal(kx, (batch, 3, 4), dtype=jnp.float32)   # Flatten -> 12
    params = init_params(kp)

    # Eval-mode forward (dropout = identity), matching model.eval() semantics.
    out_eval = jax.block_until_ready(dropout_model_forward(x, params, training=False))
    assert out_eval.shape == (batch, 1)
    assert bool(jnp.all((out_eval >= 0.0) & (out_eval <= 1.0)))
    ref = reference_forward(x, params)
    assert bool(jnp.allclose(out_eval, ref, rtol=5e-2, atol=5e-2))

    # Training-mode forward exercises the masked-dropout path.
    out_train = jax.block_until_ready(
        dropout_model_forward(x, params, seed=1234, training=True))
    assert out_train.shape == (batch, 1)
    assert bool(jnp.all(jnp.isfinite(out_train)))

    print("KERNEL_OK")
</pallas_src>

<mosaic_0001>
module attributes {stable_mosaic.version = 11 : i64} {
  func.func @mlp_kernel(%arg0: i32, %arg1: memref<8x12xf32, #tpu.memory_space<vmem>>, %arg2: memref<12x128xbf16, #tpu.memory_space<vmem>>, %arg3: memref<1x128xf32, #tpu.memory_space<vmem>>, %arg4: memref<128x64xbf16, #tpu.memory_space<vmem>>, %arg5: memref<1x64xf32, #tpu.memory_space<vmem>>, %arg6: memref<64x32xbf16, #tpu.memory_space<vmem>>, %arg7: memref<1x32xf32, #tpu.memory_space<vmem>>, %arg8: memref<32x16xbf16, #tpu.memory_space<vmem>>, %arg9: memref<1x16xf32, #tpu.memory_space<vmem>>, %arg10: memref<16x1xbf16, #tpu.memory_space<vmem>>, %arg11: memref<1x1xf32, #tpu.memory_space<vmem>>, %arg12: memref<8x1xf32, #tpu.memory_space<vmem>>) attributes {dimension_semantics = [#tpu.dimension_semantics<parallel>], iteration_bounds = array<i64: 1>, scalar_prefetch = 0 : i64, scratch_operands = 0 : i64, tpu.core_type = #tpu.core_type<tc>, window_params = [{transform_indices = @transform_0, window_bounds = array<i64: 8, 12>}, {pipeline_mode = #tpu.pipeline_mode<synchronous>, transform_indices = @transform_1, window_bounds = array<i64: 12, 128>}, {pipeline_mode = #tpu.pipeline_mode<synchronous>, transform_indices = @transform_2, window_bounds = array<i64: 1, 128>}, {pipeline_mode = #tpu.pipeline_mode<synchronous>, transform_indices = @transform_3, window_bounds = array<i64: 128, 64>}, {pipeline_mode = #tpu.pipeline_mode<synchronous>, transform_indices = @transform_4, window_bounds = array<i64: 1, 64>}, {pipeline_mode = #tpu.pipeline_mode<synchronous>, transform_indices = @transform_5, window_bounds = array<i64: 64, 32>}, {pipeline_mode = #tpu.pipeline_mode<synchronous>, transform_indices = @transform_6, window_bounds = array<i64: 1, 32>}, {pipeline_mode = #tpu.pipeline_mode<synchronous>, transform_indices = @transform_7, window_bounds = array<i64: 32, 16>}, {pipeline_mode = #tpu.pipeline_mode<synchronous>, transform_indices = @transform_8, window_bounds = array<i64: 1, 16>}, {pipeline_mode = #tpu.pipeline_mode<synchronous>, transform_indices = @transform_9, window_bounds = array<i64: 16, 1>}, {pipeline_mode = #tpu.pipeline_mode<synchronous>, transform_indices = @transform_10, window_bounds = array<i64: 1, 1>}, {transform_indices = @transform_11, window_bounds = array<i64: 8, 1>}]} {
    %c0 = arith.constant 0 : index
    %c0_0 = arith.constant 0 : index
    %0 = vector.load %arg1[%c0, %c0_0] : memref<8x12xf32, #tpu.memory_space<vmem>>, vector<8x12xf32>
    %1 = arith.truncf %0 : vector<8x12xf32> to vector<8x12xbf16>
    %c0_1 = arith.constant 0 : index
    %c0_2 = arith.constant 0 : index
    %2 = vector.load %arg2[%c0_1, %c0_2] : memref<12x128xbf16, #tpu.memory_space<vmem>>, vector<12x128xbf16>
    %cst = arith.constant dense<0.000000e+00> : vector<8x128xf32>
    %3 = tpu.matmul %1, %2, %cst {dimension_numbers = #tpu.dot_dimension_numbers<[1], [0], [0], [1], [0, 0, 1, 1], [], []>} : vector<8x12xbf16>, vector<12x128xbf16>, vector<8x128xf32> -> vector<8x128xf32>
    %c0_3 = arith.constant 0 : index
    %c0_4 = arith.constant 0 : index
    %4 = vector.load %arg3[%c0_3, %c0_4] : memref<1x128xf32, #tpu.memory_space<vmem>>, vector<1x128xf32>
    %5 = vector.broadcast %4 : vector<1x128xf32> to vector<8x128xf32>
    %6 = arith.addf %3, %5 : vector<8x128xf32>
    %cst_5 = arith.constant 0.000000e+00 : f32
    %7 = vector.broadcast %cst_5 : f32 to vector<8x128xf32>
    %8 = arith.maximumf %6, %7 : vector<8x128xf32>
    %9 = arith.truncf %8 : vector<8x128xf32> to vector<8x128xbf16>
    %c0_6 = arith.constant 0 : index
    %c0_7 = arith.constant 0 : index
    %10 = vector.load %arg4[%c0_6, %c0_7] : memref<128x64xbf16, #tpu.memory_space<vmem>>, vector<128x64xbf16>
    %cst_8 = arith.constant dense<0.000000e+00> : vector<8x64xf32>
    %11 = tpu.matmul %9, %10, %cst_8 {dimension_numbers = #tpu.dot_dimension_numbers<[1], [0], [0], [1], [0, 0, 1, 1], [], []>} : vector<8x128xbf16>, vector<128x64xbf16>, vector<8x64xf32> -> vector<8x64xf32>
    %c0_9 = arith.constant 0 : index
    %c0_10 = arith.constant 0 : index
    %12 = vector.load %arg5[%c0_9, %c0_10] : memref<1x64xf32, #tpu.memory_space<vmem>>, vector<1x64xf32>
    %13 = vector.broadcast %12 : vector<1x64xf32> to vector<8x64xf32>
    %14 = arith.addf %11, %13 : vector<8x64xf32>
    %cst_11 = arith.constant 0.000000e+00 : f32
    %15 = vector.broadcast %cst_11 : f32 to vector<8x64xf32>
    %16 = arith.maximumf %14, %15 : vector<8x64xf32>
    %17 = arith.truncf %16 : vector<8x64xf32> to vector<8x64xbf16>
    %c0_12 = arith.constant 0 : index
    %c0_13 = arith.constant 0 : index
    %18 = vector.load %arg6[%c0_12, %c0_13] : memref<64x32xbf16, #tpu.memory_space<vmem>>, vector<64x32xbf16>
    %cst_14 = arith.constant dense<0.000000e+00> : vector<8x32xf32>
    %19 = tpu.matmul %17, %18, %cst_14 {dimension_numbers = #tpu.dot_dimension_numbers<[1], [0], [0], [1], [0, 0, 1, 1], [], []>} : vector<8x64xbf16>, vector<64x32xbf16>, vector<8x32xf32> -> vector<8x32xf32>
    %c0_15 = arith.constant 0 : index
    %c0_16 = arith.constant 0 : index
    %20 = vector.load %arg7[%c0_15, %c0_16] : memref<1x32xf32, #tpu.memory_space<vmem>>, vector<1x32xf32>
    %21 = vector.broadcast %20 : vector<1x32xf32> to vector<8x32xf32>
    %22 = arith.addf %19, %21 : vector<8x32xf32>
    %cst_17 = arith.constant 0.000000e+00 : f32
    %23 = vector.broadcast %cst_17 : f32 to vector<8x32xf32>
    %24 = arith.maximumf %22, %23 : vector<8x32xf32>
    %25 = arith.truncf %24 : vector<8x32xf32> to vector<8x32xbf16>
    %c0_18 = arith.constant 0 : index
    %c0_19 = arith.constant 0 : index
    %26 = vector.load %arg8[%c0_18, %c0_19] : memref<32x16xbf16, #tpu.memory_space<vmem>>, vector<32x16xbf16>
    %cst_20 = arith.constant dense<0.000000e+00> : vector<8x16xf32>
    %27 = tpu.matmul %25, %26, %cst_20 {dimension_numbers = #tpu.dot_dimension_numbers<[1], [0], [0], [1], [0, 0, 1, 1], [], []>} : vector<8x32xbf16>, vector<32x16xbf16>, vector<8x16xf32> -> vector<8x16xf32>
    %c0_21 = arith.constant 0 : index
    %c0_22 = arith.constant 0 : index
    %28 = vector.load %arg9[%c0_21, %c0_22] : memref<1x16xf32, #tpu.memory_space<vmem>>, vector<1x16xf32>
    %29 = vector.broadcast %28 : vector<1x16xf32> to vector<8x16xf32>
    %30 = arith.addf %27, %29 : vector<8x16xf32>
    %cst_23 = arith.constant 0.000000e+00 : f32
    %31 = vector.broadcast %cst_23 : f32 to vector<8x16xf32>
    %32 = arith.maximumf %30, %31 : vector<8x16xf32>
    %33 = arith.truncf %32 : vector<8x16xf32> to vector<8x16xbf16>
    %c0_24 = arith.constant 0 : index
    %c0_25 = arith.constant 0 : index
    %34 = vector.load %arg10[%c0_24, %c0_25] : memref<16x1xbf16, #tpu.memory_space<vmem>>, vector<16x1xbf16>
    %cst_26 = arith.constant dense<0.000000e+00> : vector<8x1xf32>
    %35 = tpu.matmul %33, %34, %cst_26 {dimension_numbers = #tpu.dot_dimension_numbers<[1], [0], [0], [1], [0, 0, 1, 1], [], []>} : vector<8x16xbf16>, vector<16x1xbf16>, vector<8x1xf32> -> vector<8x1xf32>
    %c0_27 = arith.constant 0 : index
    %c0_28 = arith.constant 0 : index
    %36 = vector.load %arg11[%c0_27, %c0_28] : memref<1x1xf32, #tpu.memory_space<vmem>>, vector<1x1xf32>
    %37 = vector.broadcast %36 : vector<1x1xf32> to vector<8x1xf32>
    %38 = arith.addf %35, %37 : vector<8x1xf32>
    %39 = arith.negf %38 : vector<8x1xf32>
    %40 = math.exp %39 : vector<8x1xf32>
    %cst_29 = arith.constant 1.000000e+00 : f32
    %41 = vector.broadcast %cst_29 : f32 to vector<8x1xf32>
    %42 = arith.addf %41, %40 : vector<8x1xf32>
    %43 = arith.divf %41, %42 : vector<8x1xf32>
    %c0_30 = arith.constant 0 : index
    %c0_31 = arith.constant 0 : index
    %44 = vector.load %arg12[%c0_30, %c0_31] : memref<8x1xf32, #tpu.memory_space<vmem>>, vector<8x1xf32>
    tpu.vector_store %arg12[%c0_30, %c0_31], %43 {strides = array<i32>} : memref<8x1xf32, #tpu.memory_space<vmem>>, vector<8x1xf32>,
    return
  }
  func.func @transform_0(%arg0: i32) -> (i32, i32) {
    %c0_i32 = arith.constant 0 : i32
    %c0_i32_0 = arith.constant 0 : i32
    return %arg0, %c0_i32 : i32, i32
  }
  func.func @transform_1(%arg0: i32) -> (i32, i32) {
    %c0_i32 = arith.constant 0 : i32
    %c0_i32_0 = arith.constant 0 : i32
    %c0_i32_1 = arith.constant 0 : i32
    return %c0_i32, %c0_i32_0 : i32, i32
  }
  func.func @transform_2(%arg0: i32) -> (i32, i32) {
    %c0_i32 = arith.constant 0 : i32
    %c0_i32_0 = arith.constant 0 : i32
    %c0_i32_1 = arith.constant 0 : i32
    return %c0_i32, %c0_i32_0 : i32, i32
  }
  func.func @transform_3(%arg0: i32) -> (i32, i32) {
    %c0_i32 = arith.constant 0 : i32
    %c0_i32_0 = arith.constant 0 : i32
    %c0_i32_1 = arith.constant 0 : i32
    return %c0_i32, %c0_i32_0 : i32, i32
  }
  func.func @transform_4(%arg0: i32) -> (i32, i32) {
    %c0_i32 = arith.constant 0 : i32
    %c0_i32_0 = arith.constant 0 : i32
    %c0_i32_1 = arith.constant 0 : i32
    return %c0_i32, %c0_i32_0 : i32, i32
  }
  func.func @transform_5(%arg0: i32) -> (i32, i32) {
    %c0_i32 = arith.constant 0 : i32
    %c0_i32_0 = arith.constant 0 : i32
    %c0_i32_1 = arith.constant 0 : i32
    return %c0_i32, %c0_i32_0 : i32, i32
  }
  func.func @transform_6(%arg0: i32) -> (i32, i32) {
    %c0_i32 = arith.constant 0 : i32
    %c0_i32_0 = arith.constant 0 : i32
    %c0_i32_1 = arith.constant 0 : i32
    return %c0_i32, %c0_i32_0 : i32, i32
  }
  func.func @transform_7(%arg0: i32) -> (i32, i32) {
    %c0_i32 = arith.constant 0 : i32
    %c0_i32_0 = arith.constant 0 : i32
    %c0_i32_1 = arith.constant 0 : i32
    return %c0_i32, %c0_i32_0 : i32, i32
  }
  func.func @transform_8(%arg0: i32) -> (i32, i32) {
    %c0_i32 = arith.constant 0 : i32
    %c0_i32_0 = arith.constant 0 : i32
    %c0_i32_1 = arith.constant 0 : i32
    return %c0_i32, %c0_i32_0 : i32, i32
  }
  func.func @transform_9(%arg0: i32) -> (i32, i32) {
    %c0_i32 = arith.constant 0 : i32
    %c0_i32_0 = arith.constant 0 : i32
    %c0_i32_1 = arith.constant 0 : i32
    return %c0_i32, %c0_i32_0 : i32, i32
  }
  func.func @transform_10(%arg0: i32) -> (i32, i32) {
    %c0_i32 = arith.constant 0 : i32
    %c0_i32_0 = arith.constant 0 : i32
    %c0_i32_1 = arith.constant 0 : i32
    return %c0_i32, %c0_i32_0 : i32, i32
  }
  func.func @transform_11(%arg0: i32) -> (i32, i32) {
    %c0_i32 = arith.constant 0 : i32
    %c0_i32_0 = arith.constant 0 : i32
    return %arg0, %c0_i32 : i32, i32
  }
}

</mosaic_0001>

<llo_original>
// kernel: tpu_custom_call.1
$region0: #{tpu_custom_call.1}
  #allocation0 [shape = 'u32[]', space=smem, size = 0x4, offset = 0x4, fixed_abs, tag = 'smem constant byte address 0x4 - core index']
  #allocation1 [shape = 'u32[72,128]{1,0:T(1,128)}', space=vmem, size = 0x9000, scoped, tag = 'internal scratch']
  #allocation2 [shape = 'f32[1,1]{1,0:T(1,128)S(1)}', space=vmem, size = 0x200, scoped, tag = 'scoped memory for tpu_custom_call.1']
  %s0 = inlined_call_operand.vmem [shape: f32[8,12], index: 0, kind: input, shape index: {}]
  %s1 = inlined_call_operand.vmem [shape: bf16[12,128], index: 1, kind: input, shape index: {}]
  %s2 = inlined_call_operand.vmem [shape: f32[1,128], index: 2, kind: input, shape index: {}]
  %s3 = inlined_call_operand.vmem [shape: bf16[128,64], index: 3, kind: input, shape index: {}]
  %s4 = inlined_call_operand.vmem [shape: f32[1,64], index: 4, kind: input, shape index: {}]
  %s5 = inlined_call_operand.vmem [shape: bf16[64,32], index: 5, kind: input, shape index: {}]
  %s6 = inlined_call_operand.vmem [shape: f32[1,32], index: 6, kind: input, shape index: {}]
  %s7 = inlined_call_operand.vmem [shape: bf16[32,16], index: 7, kind: input, shape index: {}]
  %s8 = inlined_call_operand.vmem [shape: f32[1,16], index: 8, kind: input, shape index: {}]
  %s9 = inlined_call_operand.vmem [shape: bf16[16,1], index: 9, kind: input, shape index: {}]
  %s10 = inlined_call_operand.<no memory space> [shape: f32[1,1], index: 10, kind: input, shape index: {}]
  %s11 = inlined_call_operand.vmem [shape: f32[8,1], index: 11, kind: output, shape index: {}]
  %s12 = sld [smem:[#allocation0]]
  $region54: #{tpu_custom_call.1} parent=0
    _
  %s14 = ssub.s32 1, %s12
  %s15 = scalar_select 0, %s14, %s12
  %v16 = vstv %s10
  %17 = vst [vmem:[#allocation2] sm:$0x1] %v16
  // Predicated region
  $region2: #{tpu_custom_call.1} parent=0 // pred_check
    _
  $region3: #{tpu_custom_call.1} parent=0 // pred_check_branch
    %19 = sbr.rel (0) target = $region5
  $region4: #{tpu_custom_call.1} parent=0 // pred_region
    _
  $region5: #{tpu_custom_call.1} parent=0 // pred_fallthru
    _
  // Predicated region
  $region6: #{tpu_custom_call.1} parent=0 // pred_check
    _
  $region7: #{tpu_custom_call.1} parent=0 // pred_check_branch
    %21 = sbr.rel (0) target = $region9
  $region8: #{tpu_custom_call.1} parent=0 // pred_region
    _
  $region9: #{tpu_custom_call.1} parent=0 // pred_fallthru
    _
  // Predicated region
  $region10: #{tpu_custom_call.1} parent=0 // pred_check
    _
  $region11: #{tpu_custom_call.1} parent=0 // pred_check_branch
    %23 = sbr.rel (0) target = $region13
  $region12: #{tpu_custom_call.1} parent=0 // pred_region
    _
  $region13: #{tpu_custom_call.1} parent=0 // pred_fallthru
    _
  // Predicated region
  $region14: #{tpu_custom_call.1} parent=0 // pred_check
    _
  $region15: #{tpu_custom_call.1} parent=0 // pred_check_branch
    %25 = sbr.rel (0) target = $region17
  $region16: #{tpu_custom_call.1} parent=0 // pred_region
    _
  $region17: #{tpu_custom_call.1} parent=0 // pred_fallthru
    _
  // Predicated region
  $region18: #{tpu_custom_call.1} parent=0 // pred_check
    _
  $region19: #{tpu_custom_call.1} parent=0 // pred_check_branch
    %27 = sbr.rel (0) target = $region21
  $region20: #{tpu_custom_call.1} parent=0 // pred_region
    _
  $region21: #{tpu_custom_call.1} parent=0 // pred_fallthru
    _
  // Predicated region
  $region22: #{tpu_custom_call.1} parent=0 // pred_check
    _
  $region23: #{tpu_custom_call.1} parent=0 // pred_check_branch
    %29 = sbr.rel (0) target = $region25
  $region24: #{tpu_custom_call.1} parent=0 // pred_region
    _
  $region25: #{tpu_custom_call.1} parent=0 // pred_fallthru
    _
  // Predicated region
  $region26: #{tpu_custom_call.1} parent=0 // pred_check
    _
  $region27: #{tpu_custom_call.1} parent=0 // pred_check_branch
    %31 = sbr.rel (0) target = $region29
  $region28: #{tpu_custom_call.1} parent=0 // pred_region
    _
  $region29: #{tpu_custom_call.1} parent=0 // pred_fallthru
    _
  // Predicated region
  $region30: #{tpu_custom_call.1} parent=0 // pred_check
    _
  $region31: #{tpu_custom_call.1} parent=0 // pred_check_branch
    %33 = sbr.rel (0) target = $region33
  $region32: #{tpu_custom_call.1} parent=0 // pred_region
    _
  $region33: #{tpu_custom_call.1} parent=0 // pred_fallthru
    _
  // Predicated region
  $region34: #{tpu_custom_call.1} parent=0 // pred_check
    _
  $region35: #{tpu_custom_call.1} parent=0 // pred_check_branch
    %35 = sbr.rel (0) target = $region37
  $region36: #{tpu_custom_call.1} parent=0 // pred_region
    _
  $region37: #{tpu_custom_call.1} parent=0 // pred_fallthru
    _
  // Predicated region
  $region38: #{tpu_custom_call.1} parent=0 // pred_check
    _
  $region39: #{tpu_custom_call.1} parent=0 // pred_check_branch
    %37 = sbr.rel (0) target = $region41
  $region40: #{tpu_custom_call.1} parent=0 // pred_region
    _
  $region41: #{tpu_custom_call.1} parent=0 // pred_fallthru
    _
  // Predicated region
  $region42: #{tpu_custom_call.1} parent=0 // pred_check
    _
  $region43: #{tpu_custom_call.1} parent=0 // pred_check_branch
    %39 = sbr.rel (0) target = $region45
  $region44: #{tpu_custom_call.1} parent=0 // pred_region
    _
  $region45: #{tpu_custom_call.1} parent=0 // pred_fallthru
    _
  %v41 = vld [vmem:[%s0] sm:$0xff]
  %v42 = vpack.c.bf16 %v41, %v41
  %v43 = vld [vmem:[%s1] sm:$0xf]
  %v44 = vld [vmem:[%s1 + $0x4] sm:$0x3]
  %v45 = vld [vmem:[%s2] sm:$0x1]
  %v47 = vperm.slane %v45, 0
  %v51 = vunpack.c.l.b16 %v43
  %v52 = vunpack.c.l.b16 %v44
  %v53 = vpack.c.b16 %v52, %v51
  %vm54 = vcmask 97280
  %v56 = vsel %vm54, %v42, 0
  %vm58 = vcmask 1045504
  %v60 = vsel %vm58, %v53, 0
  %62 = vmatpush.bf16.msra.mxu0 0
  %63 = vmatpush.bf16.msra.mxu0 0
  %64 = vmatpush.bf16.msra.mxu0 0
  %65 = vmatpush.bf16.msra.mxu0 0
  %66 = vmatpush.bf16.msra.mxu0 0
  %67 = vmatpush.bf16.msra.mxu0 0
  %68 = vmatpush.bf16.msra.mxu0 0
  %69 = vmatpush.bf16.msra.mxu0 %v60
  %70 = vmatmul.bf16.gmra.mxu0 %v56
  %v71 = vpop.f32.mrf.mxu0
  %v72 = vadd.f32 %v47, %v71
  %v73 = vpop.f32.mrf.mxu0
  %74 = vdwg.mxu0
  %v75 = vmax.f32 %v72, 0.0
  %v76 = vpack.c.bf16 %v75, %v75
  %v77 = vld [vmem:[%s3] sm:$0xf]
  %v78 = vld [vmem:[%s3 + $0x4] sm:$0xf]
  %v79 = vld [vmem:[%s3 + $0x8] sm:$0xf]
  %v80 = vld [vmem:[%s3 + $0xc] sm:$0xf]
  %v81 = vld [vmem:[%s3 + $0x10] sm:$0xf]
  %v82 = vld [vmem:[%s3 + $0x14] sm:$0xf]
  %v83 = vld [vmem:[%s3 + $0x18] sm:$0xf]
  %v84 = vld [vmem:[%s3 + $0x1c] sm:$0xf]
  %v85 = vld [vmem:[%s3 + $0x20] sm:$0xf]
  %v86 = vld [vmem:[%s3 + $0x24] sm:$0xf]
  %v87 = vld [vmem:[%s3 + $0x28] sm:$0xf]
  %v88 = vld [vmem:[%s3 + $0x2c] sm:$0xf]
  %v89 = vld [vmem:[%s3 + $0x30] sm:$0xf]
  %v90 = vld [vmem:[%s3 + $0x34] sm:$0xf]
  %v91 = vld [vmem:[%s3 + $0x38] sm:$0xf]
  %v92 = vld [vmem:[%s3 + $0x3c] sm:$0xf]
  %v93 = vld [vmem:[%s4] sm:$0x1]
  %v95 = vperm.slane %v93, 0
  %v113 = vunpack.c.l.b16 %v77
  %v114 = vunpack.c.l.b16 %v78
  %v115 = vunpack.c.l.b16 %v79
  %v116 = vunpack.c.l.b16 %v80
  %v117 = vunpack.c.l.b16 %v81
  %v118 = vunpack.c.l.b16 %v82
  %v119 = vunpack.c.l.b16 %v83
  %v120 = vunpack.c.l.b16 %v84
  %v121 = vunpack.c.l.b16 %v85
  %v122 = vunpack.c.l.b16 %v86
  %v123 = vunpack.c.l.b16 %v87
  %v124 = vunpack.c.l.b16 %v88
  %v125 = vunpack.c.l.b16 %v89
  %v126 = vunpack.c.l.b16 %v90
  %v127 = vunpack.c.l.b16 %v91
  %v128 = vunpack.c.l.b16 %v92
  %v129 = vpack.c.b16 %v114, %v113
  %v130 = vpack.c.b16 %v116, %v115
  %v131 = vpack.c.b16 %v118, %v117
  %v132 = vpack.c.b16 %v120, %v119
  %v133 = vpack.c.b16 %v122, %v121
  %v134 = vpack.c.b16 %v124, %v123
  %v135 = vpack.c.b16 %v126, %v125
  %v136 = vpack.c.b16 %v128, %v127
  %145 = vmatpush.bf16.msra.mxu0 %v136
  %146 = vmatpush.bf16.msra.mxu0 %v135
  %147 = vmatpush.bf16.msra.mxu0 %v134
  %148 = vmatpush.bf16.msra.mxu0 %v133
  %149 = vmatpush.bf16.msra.mxu0 %v132
  %150 = vmatpush.bf16.msra.mxu0 %v131
  %151 = vmatpush.bf16.msra.mxu0 %v130
  %152 = vmatpush.bf16.msra.mxu0 %v129
  %153 = vmatmul.bf16.gmra.mxu0 %v76
  %v154 = vpop.f32.mrf.mxu0
  %v155 = vadd.f32 %v95, %v154
  %v156 = vpop.f32.mrf.mxu0
  %157 = vdwg.mxu0
  %v158 = vmax.f32 %v155, 0.0
  %v159 = vpack.c.bf16 %v158, %v158
  %v160 = vld [vmem:[%s5] sm:$0xf]
  %v161 = vld [vmem:[%s5 + $0x4] sm:$0xf]
  %v162 = vld [vmem:[%s5 + $0x8] sm:$0xf]
  %v163 = vld [vmem:[%s5 + $0xc] sm:$0xf]
  %v164 = vld [vmem:[%s5 + $0x10] sm:$0xf]
  %v165 = vld [vmem:[%s5 + $0x14] sm:$0xf]
  %v166 = vld [vmem:[%s5 + $0x18] sm:$0xf]
  %v167 = vld [vmem:[%s5 + $0x1c] sm:$0xf]
  %v168 = vld [vmem:[%s6] sm:$0x1]
  %v170 = vperm.slane %v168, 0
  %v180 = vunpack.c.l.b16 %v160
  %v181 = vunpack.c.l.b16 %v161
  %v182 = vunpack.c.l.b16 %v162
  %v183 = vunpack.c.l.b16 %v163
  %v184 = vunpack.c.l.b16 %v164
  %v185 = vunpack.c.l.b16 %v165
  %v186 = vunpack.c.l.b16 %v166
  %v187 = vunpack.c.l.b16 %v167
  %v188 = vpack.c.b16 %v181, %v180
  %v189 = vpack.c.b16 %v183, %v182
  %v190 = vpack.c.b16 %v185, %v184
  %v191 = vpack.c.b16 %v187, %v186
  %vm196 = vcmask 523264
  %v198 = vsel %vm196, %v159, 0
  %200 = vmatpush.bf16.msra.mxu0 0
  %201 = vmatpush.bf16.msra.mxu0 0
  %202 = vmatpush.bf16.msra.mxu0 0
  %203 = vmatpush.bf16.msra.mxu0 0
  %204 = vmatpush.bf16.msra.mxu0 %v191
  %205 = vmatpush.bf16.msra.mxu0 %v190
  %206 = vmatpush.bf16.msra.mxu0 %v189
  %207 = vmatpush.bf16.msra.mxu0 %v188
  %208 = vmatmul.bf16.gmra.mxu0 %v198
  %v209 = vpop.f32.mrf.mxu0
  %v210 = vadd.f32 %v170, %v209
  %v211 = vpop.f32.mrf.mxu0
  %212 = vdwg.mxu0
  %v213 = vmax.f32 %v210, 0.0
  %v214 = vpack.c.bf16 %v213, %v213
  %v215 = vld [vmem:[%s7] sm:$0xf]
  %v216 = vld [vmem:[%s7 + $0x4] sm:$0xf]
  %v217 = vld [vmem:[%s7 + $0x8] sm:$0xf]
  %v218 = vld [vmem:[%s7 + $0xc] sm:$0xf]
  %v219 = vld [vmem:[%s8] sm:$0x1]
  %v221 = vperm.slane %v219, 0
  %v227 = vunpack.c.l.b16 %v215
  %v228 = vunpack.c.l.b16 %v216
  %v229 = vunpack.c.l.b16 %v217
  %v230 = vunpack.c.l.b16 %v218
  %v231 = vpack.c.b16 %v228, %v227
  %v232 = vpack.c.b16 %v230, %v229
  %vm235 = vcmask 261120
  %v237 = vsel %vm235, %v214, 0
  %239 = vmatpush.bf16.msra.mxu0 0
  %240 = vmatpush.bf16.msra.mxu0 0
  %241 = vmatpush.bf16.msra.mxu0 0
  %242 = vmatpush.bf16.msra.mxu0 0
  %243 = vmatpush.bf16.msra.mxu0 0
  %244 = vmatpush.bf16.msra.mxu0 0
  %245 = vmatpush.bf16.msra.mxu0 %v232
  %246 = vmatpush.bf16.msra.mxu0 %v231
  %247 = vmatmul.bf16.gmra.mxu0 %v237
  %v248 = vpop.f32.mrf.mxu0
  %v249 = vadd.f32 %v221, %v248
  %v250 = vpop.f32.mrf.mxu0
  %251 = vdwg.mxu0
  %v252 = vmax.f32 %v249, 0.0
  %v253 = vpack.c.bf16 %v252, %v252
  %v254 = vld [vmem:[%s9] sm:$0xf]
  %v255 = vld [vmem:[%s9 + $0x4] sm:$0xf]
  %v256 = vld [vmem:[#allocation2] sm:$0x1]
  %v258 = vperm.slane %v256, 0
  %v262 = vunpack.c.l.b16 %v254
  %v263 = vunpack.c.l.b16 %v255
  %v264 = vpack.c.b16 %v263, %v262
  %vm266 = vcmask 130048
  %v268 = vsel %vm266, %v253, 0
  %270 = vmatpush.bf16.msra.mxu0 0
  %271 = vmatpush.bf16.msra.mxu0 0
  %272 = vmatpush.bf16.msra.mxu0 0
  %273 = vmatpush.bf16.msra.mxu0 0
  %274 = vmatpush.bf16.msra.mxu0 0
  %275 = vmatpush.bf16.msra.mxu0 0
  %276 = vmatpush.bf16.msra.mxu0 0
  %277 = vmatpush.bf16.msra.mxu0 %v264
  %278 = vmatmul.bf16.gmra.mxu0 %v268
  %v279 = vpop.f32.mrf.mxu0
  %v280 = vadd.f32 %v258, %v279
  %v281 = vpop.f32.mrf.mxu0
  %282 = vdwg.mxu0
  %v283 = vxor.u32 %v280, 2147483648
  %v284 = vmul.f32 %v283, 1.442695
  %v285 = vpow.pop %v284
  %v286 = vadd.f32 %v285, 1.0
  %v287 = vrcp.pop %v286
  %v288 = vmul.f32 %v286, %v287
  %v289 = vsub.f32 1.0, %v288
  %v290 = vmul.f32 %v287, %v289
  %v291 = vadd.f32 %v287, %v290
  %vm292 = vweird.f32 %v286
  %vm293 = vweird.f32 %v287
  %vm294 = vmor %vm292, %vm293
  %v295 = vsel %vm294, %v287, %v291
  %v296 = vand.u32 2147483647, %v286
  %vm297 = vcmp.eq.f32.partialorder %v296, 8.507059e+37
  %v298 = vand.u32 %v286, 2147483648
  %v299 = vor.u32 1.1754944e-38, %v298
  %v300 = vsel %vm297, %v299, %v295
  %v301 = vmul.f32 1.0, %v300
  %vm302 = vcmask 7168
  %303 = vst.msk [vmem:[%s11] sm:$0xff] %vm302, %v301
  // Predicated region
  $region46: #{tpu_custom_call.1} parent=0 // pred_check
    _
  $region47: #{tpu_custom_call.1} parent=0 // pred_check_branch
    %305 = sbr.rel (0) target = $region49
  $region48: #{tpu_custom_call.1} parent=0 // pred_region
    _
  $region49: #{tpu_custom_call.1} parent=0 // pred_fallthru
    _
  // Predicated region
  $region50: #{tpu_custom_call.1} parent=0 // pred_check
    _
  $region51: #{tpu_custom_call.1} parent=0 // pred_check_branch
    %307 = sbr.rel (0) target = $region53
  $region52: #{tpu_custom_call.1} parent=0 // pred_region
    _
  $region53: #{tpu_custom_call.1} parent=0 // pred_fallthru
    _

</llo_original>
